<compile_context>
chip_gen: v7x
topology: tpu7x:2x2x1
jax: 0.10.0
libtpu: 0.0.40
codegen_flags: <defaults>
</compile_context>

<pallas_src>
import functools

import jax
import jax.numpy as jnp
from jax.experimental import pallas as pl
from jax.experimental.pallas import tpu as pltpu

BN_EPS = 1e-5


def _round_up(x, m):
    return (x + m - 1) // m * m


# ----------------------------------------------------------------------------- kernel
def _fused_mlp_kernel(x_ref, w_ref, b_ref, o_ref, *, n_layers):
    """Fused MLP: chain of (BN-folded Linear) -> bias -> ReLU, all in one kernel."""
    h = x_ref[...]                                    # (TB, P) f32
    for l in range(n_layers):                         # static unroll; never leaves VMEM
        h = jnp.dot(h, w_ref[l], preferred_element_type=jnp.float32)   # MXU
        h = jnp.maximum(h + b_ref[l], 0.0)            # bias + ReLU (final layer too — module bug)
    o_ref[...] = h.astype(o_ref.dtype)


def fused_mlp(x_pad, ws, bs, *, batch_tile):
    Bp, P = x_pad.shape
    L = ws.shape[0]
    kernel = functools.partial(_fused_mlp_kernel, n_layers=L)
    return pl.pallas_call(
        kernel,
        out_shape=jax.ShapeDtypeStruct((Bp, P), jnp.float32),
        grid_spec=pltpu.PrefetchScalarGridSpec(
            num_scalar_prefetch=0,
            grid=(Bp // batch_tile,),
            in_specs=[
                pl.BlockSpec((batch_tile, P), lambda i: (i, 0)),
                pl.BlockSpec((L, P, P), lambda i: (0, 0, 0)),   # weights resident across tiles
                pl.BlockSpec((L, 1, P), lambda i: (0, 0, 0)),   # biases resident across tiles
            ],
            out_specs=pl.BlockSpec((batch_tile, P), lambda i: (i, 0)),
        ),
        compiler_params=pltpu.CompilerParams(
            dimension_semantics=("parallel",)),        # batch tiles shard across TCs (v7x)
    )(x_pad, ws, bs)


# ----------------------------------------------------------------------------- params
def init_params(key, input_dim, hidden_dims, num_classes):
    """Deterministic parameters matching the module's layer sizes (torch Linear init range)."""
    layer_size = [input_dim] + list(hidden_dims) + [num_classes]
    raw = []
    for n_in, n_out in zip(layer_size[:-1], layer_size[1:]):
        key, kw, kb = jax.random.split(key, 3)
        bound = 1.0 / float(n_in) ** 0.5
        w = jax.random.uniform(kw, (n_out, n_in), jnp.float32, -bound, bound)
        b = jax.random.uniform(kb, (n_out,), jnp.float32, -bound, bound)
        # BatchNorm1d(n_in) running state (fresh init: mean=0, var=1, gamma=1, beta=0).
        raw.append(dict(
            w=w, b=b,
            gamma=jnp.ones((n_in,), jnp.float32),
            beta=jnp.zeros((n_in,), jnp.float32),
            mean=jnp.zeros((n_in,), jnp.float32),
            var=jnp.ones((n_in,), jnp.float32),
            n_in=n_in, n_out=n_out,
        ))
    return raw


def fold_and_pad(raw_params, bn, pad_width):
    """Fold eval-mode BN into each Linear and zero-pad every layer to a common
    128-multiple lane width so the kernel runs on full vregs with unmasked stores."""
    L, P = len(raw_params), pad_width
    ws = jnp.zeros((L, P, P), jnp.float32)
    bs = jnp.zeros((L, 1, P), jnp.float32)
    for l, p in enumerate(raw_params):
        n_in, n_out = p["n_in"], p["n_out"]
        w_t = p["w"].T                                        # (n_in, n_out)
        b = p["b"]
        if bn:
            s = p["gamma"] * jax.lax.rsqrt(p["var"] + BN_EPS)  # (n_in,)
            w_t = w_t * s[:, None]                             # fold scale into weights
            b = b + (p["beta"] - p["mean"] * s) @ p["w"].T     # fold shift into bias
        ws = ws.at[l, :n_in, :n_out].set(w_t)
        bs = bs.at[l, 0, :n_out].set(b)
    return ws, bs


# ----------------------------------------------------------------------------- forward
@functools.partial(jax.jit, static_argnames=("num_classes",))
def feedforward_forward(x, ws, bs, *, num_classes):
    B, D = x.shape
    P = ws.shape[-1]
    batch_tile = min(512, _round_up(B, 8))     # small batch -> single full-block tile
    Bp = _round_up(B, batch_tile)
    x_pad = jnp.zeros((Bp, P), jnp.float32).at[:B, :D].set(x)
    out_pad = fused_mlp(x_pad, ws, bs, batch_tile=batch_tile)
    return out_pad[:B, :num_classes]


# ----------------------------------------------------------------------------- main
if __name__ == "__main__":
    batch = 8
    input_dim = 32
    hidden_dims = [64, 48]
    num_classes = 16
    bn = True
    drop = 0.1   # Dropout is identity at inference time.

    key = jax.random.PRNGKey(0)
    kx, kp = jax.random.split(key)
    x = jax.random.normal(kx, (batch, input_dim), jnp.float32)

    raw = init_params(kp, input_dim, hidden_dims, num_classes)
    layer_size = [input_dim] + list(hidden_dims) + [num_classes]
    P = _round_up(max(layer_size), 128)
    ws, bs = fold_and_pad(raw, bn, P)

    out = feedforward_forward(x, ws, bs, num_classes=num_classes)
    out = jax.block_until_ready(out)

    # Pure-JAX reference with the UNFOLDED per-layer math (BN -> Dropout(id) -> Linear -> ReLU).
    ref = x
    for p in raw:
        h = ref
        if bn:
            h = (h - p["mean"]) * (p["gamma"] * jax.lax.rsqrt(p["var"] + BN_EPS)) + p["beta"]
        ref = jnp.maximum(h @ p["w"].T + p["b"], 0.0)

    assert out.shape == (batch, num_classes), out.shape
    assert jnp.allclose(out, ref, atol=1e-5, rtol=1e-5), float(jnp.max(jnp.abs(out - ref)))

    print("KERNEL_OK")
</pallas_src>

<mosaic_0001>
module attributes {stable_mosaic.version = 11 : i64} {
  func.func @_fused_mlp_kernel(%arg0: i32, %arg1: memref<8x128xf32, #tpu.memory_space<vmem>>, %arg2: memref<3x128x128xf32, #tpu.memory_space<vmem>>, %arg3: memref<3x1x128xf32, #tpu.memory_space<vmem>>, %arg4: memref<8x128xf32, #tpu.memory_space<vmem>>) attributes {dimension_semantics = [#tpu.dimension_semantics<parallel>], iteration_bounds = array<i64: 1>, scalar_prefetch = 0 : i64, scratch_operands = 0 : i64, tpu.core_type = #tpu.core_type<tc>, window_params = [{transform_indices = @transform_0, window_bounds = array<i64: 8, 128>}, {pipeline_mode = #tpu.pipeline_mode<synchronous>, transform_indices = @transform_1, window_bounds = array<i64: 3, 128, 128>}, {pipeline_mode = #tpu.pipeline_mode<synchronous>, transform_indices = @transform_2, window_bounds = array<i64: 3, 1, 128>}, {transform_indices = @transform_3, window_bounds = array<i64: 8, 128>}]} {
    %c0 = arith.constant 0 : index
    %c0_0 = arith.constant 0 : index
    %0 = vector.load %arg1[%c0, %c0_0] : memref<8x128xf32, #tpu.memory_space<vmem>>, vector<8x128xf32>
    %c0_1 = arith.constant 0 : index
    %c0_2 = arith.constant 0 : index
    %c0_3 = arith.constant 0 : index
    %1 = vector.load %arg2[%c0_1, %c0_2, %c0_3] : memref<3x128x128xf32, #tpu.memory_space<vmem>>, vector<1x128x128xf32>
    %2 = vector.shape_cast %1 : vector<1x128x128xf32> to vector<128x128xf32>
    %cst = arith.constant dense<0.000000e+00> : vector<8x128xf32>
    %3 = tpu.matmul %0, %2, %cst {dimension_numbers = #tpu.dot_dimension_numbers<[1], [0], [0], [1], [0, 0, 1, 1], [], []>} : vector<8x128xf32>, vector<128x128xf32>, vector<8x128xf32> -> vector<8x128xf32>
    %c0_4 = arith.constant 0 : index
    %c0_5 = arith.constant 0 : index
    %c0_6 = arith.constant 0 : index
    %4 = vector.load %arg3[%c0_4, %c0_5, %c0_6] : memref<3x1x128xf32, #tpu.memory_space<vmem>>, vector<1x1x128xf32>
    %5 = vector.shape_cast %4 : vector<1x1x128xf32> to vector<1x128xf32>
    %6 = vector.broadcast %5 : vector<1x128xf32> to vector<8x128xf32>
    %7 = arith.addf %3, %6 : vector<8x128xf32>
    %cst_7 = arith.constant 0.000000e+00 : f32
    %8 = vector.broadcast %cst_7 : f32 to vector<8x128xf32>
    %9 = arith.maximumf %7, %8 : vector<8x128xf32>
    %c1 = arith.constant 1 : index
    %c0_8 = arith.constant 0 : index
    %c0_9 = arith.constant 0 : index
    %10 = vector.load %arg2[%c1, %c0_8, %c0_9] : memref<3x128x128xf32, #tpu.memory_space<vmem>>, vector<1x128x128xf32>
    %11 = vector.shape_cast %10 : vector<1x128x128xf32> to vector<128x128xf32>
    %cst_10 = arith.constant dense<0.000000e+00> : vector<8x128xf32>
    %12 = tpu.matmul %9, %11, %cst_10 {dimension_numbers = #tpu.dot_dimension_numbers<[1], [0], [0], [1], [0, 0, 1, 1], [], []>} : vector<8x128xf32>, vector<128x128xf32>, vector<8x128xf32> -> vector<8x128xf32>
    %c1_11 = arith.constant 1 : index
    %c0_12 = arith.constant 0 : index
    %c0_13 = arith.constant 0 : index
    %13 = vector.load %arg3[%c1_11, %c0_12, %c0_13] : memref<3x1x128xf32, #tpu.memory_space<vmem>>, vector<1x1x128xf32>
    %14 = vector.shape_cast %13 : vector<1x1x128xf32> to vector<1x128xf32>
    %15 = vector.broadcast %14 : vector<1x128xf32> to vector<8x128xf32>
    %16 = arith.addf %12, %15 : vector<8x128xf32>
    %cst_14 = arith.constant 0.000000e+00 : f32
    %17 = vector.broadcast %cst_14 : f32 to vector<8x128xf32>
    %18 = arith.maximumf %16, %17 : vector<8x128xf32>
    %c2 = arith.constant 2 : index
    %c0_15 = arith.constant 0 : index
    %c0_16 = arith.constant 0 : index
    %19 = vector.load %arg2[%c2, %c0_15, %c0_16] : memref<3x128x128xf32, #tpu.memory_space<vmem>>, vector<1x128x128xf32>
    %20 = vector.shape_cast %19 : vector<1x128x128xf32> to vector<128x128xf32>
    %cst_17 = arith.constant dense<0.000000e+00> : vector<8x128xf32>
    %21 = tpu.matmul %18, %20, %cst_17 {dimension_numbers = #tpu.dot_dimension_numbers<[1], [0], [0], [1], [0, 0, 1, 1], [], []>} : vector<8x128xf32>, vector<128x128xf32>, vector<8x128xf32> -> vector<8x128xf32>
    %c2_18 = arith.constant 2 : index
    %c0_19 = arith.constant 0 : index
    %c0_20 = arith.constant 0 : index
    %22 = vector.load %arg3[%c2_18, %c0_19, %c0_20] : memref<3x1x128xf32, #tpu.memory_space<vmem>>, vector<1x1x128xf32>
    %23 = vector.shape_cast %22 : vector<1x1x128xf32> to vector<1x128xf32>
    %24 = vector.broadcast %23 : vector<1x128xf32> to vector<8x128xf32>
    %25 = arith.addf %21, %24 : vector<8x128xf32>
    %cst_21 = arith.constant 0.000000e+00 : f32
    %26 = vector.broadcast %cst_21 : f32 to vector<8x128xf32>
    %27 = arith.maximumf %25, %26 : vector<8x128xf32>
    %c0_22 = arith.constant 0 : index
    %c0_23 = arith.constant 0 : index
    %28 = vector.load %arg4[%c0_22, %c0_23] : memref<8x128xf32, #tpu.memory_space<vmem>>, vector<8x128xf32>
    tpu.vector_store %arg4[%c0_22, %c0_23], %27 {strides = array<i32>} : memref<8x128xf32, #tpu.memory_space<vmem>>, vector<8x128xf32>,
    return
  }
  func.func @transform_0(%arg0: i32) -> (i32, i32) {
    %c0_i32 = arith.constant 0 : i32
    %c0_i32_0 = arith.constant 0 : i32
    return %arg0, %c0_i32 : i32, i32
  }
  func.func @transform_1(%arg0: i32) -> (i32, i32, i32) {
    %c0_i32 = arith.constant 0 : i32
    %c0_i32_0 = arith.constant 0 : i32
    %c0_i32_1 = arith.constant 0 : i32
    %c0_i32_2 = arith.constant 0 : i32
    return %c0_i32, %c0_i32_0, %c0_i32_1 : i32, i32, i32
  }
  func.func @transform_2(%arg0: i32) -> (i32, i32, i32) {
    %c0_i32 = arith.constant 0 : i32
    %c0_i32_0 = arith.constant 0 : i32
    %c0_i32_1 = arith.constant 0 : i32
    %c0_i32_2 = arith.constant 0 : i32
    return %c0_i32, %c0_i32_0, %c0_i32_1 : i32, i32, i32
  }
  func.func @transform_3(%arg0: i32) -> (i32, i32) {
    %c0_i32 = arith.constant 0 : i32
    %c0_i32_0 = arith.constant 0 : i32
    return %arg0, %c0_i32 : i32, i32
  }
}

</mosaic_0001>

<llo_original>
// kernel: feedforward_forward.1
$region0: #{feedforward_forward.1}
  #allocation0 [shape = 'u32[]', space=smem, size = 0x4, offset = 0x4, fixed_abs, tag = 'smem constant byte address 0x4 - core index']
  #allocation1 [shape = 'u32[144,128]{1,0:T(1,128)}', space=vmem, size = 0x12000, scoped, tag = 'internal scratch']
  %s0 = inlined_call_operand.vmem [shape: f32[8,128], index: 0, kind: input, shape index: {}]
  %s1 = inlined_call_operand.hbm [shape: f32[3,128,128], index: 1, kind: input, shape index: {}]
  %s2 = inlined_call_operand.vmem [shape: f32[3,1,128], index: 2, kind: input, shape index: {}]
  %s3 = inlined_call_operand.hbm [shape: f32[8,128], index: 3, kind: output, shape index: {}]
  %s4 = sld [smem:[#allocation0]]
  $region26: #{feedforward_forward.1} parent=0
    _
  %s6 = ssub.s32 1, %s4
  %s7 = scalar_select 0, %s6, %s4
  $region1: #{feedforward_forward.1} parent=0
    #allocation2 [shape = 'u8[196608]{0}', space=vmem, size = 0x30000, scoped, tag = 'input window, operand 1, single buffered']
    #allocation3 [shape = 's32[1]{0}', space=sflag, size = 0x4, scoped, tag = 'scoped memory for feedforward_forward.1']
    #allocation4 [shape = 's32[1]{0}', space=sflag, size = 0x4, scoped, tag = 'scoped memory for feedforward_forward.1']
    #allocation5 [shape = 'u8[4096]{0}', space=vmem, size = 0x1000, scoped, tag = 'output window, operand 0, single buffered']
    %8 = vsyncpa [#allocation3], 0
    %9 = vsyncpa [#allocation4], 0
    // Predicated region
    $region2: #{feedforward_forward.1} parent=1 // pred_check
      _
    $region3: #{feedforward_forward.1} parent=1 // pred_check_branch
      %11 = sbr.rel (0) target = $region5
    $region4: #{feedforward_forward.1} parent=1 // pred_region
      _
    $region5: #{feedforward_forward.1} parent=1 // pred_fallthru
      _
    // Predicated region
    $region6: #{feedforward_forward.1} parent=1 // pred_check
      _
    $region7: #{feedforward_forward.1} parent=1 // pred_check_branch
      %13 = sbr.rel (0) target = $region9
    $region8: #{feedforward_forward.1} parent=1 // pred_region
      %s15 = ssub.s32 6144, 6144
      %16 = vsyncadd [#allocation3], %s15
      %s17 = sshll.u32 [#allocation2], 4
      %s18 = int_to_ptr.vmem [resolvable:$true] %s17
      %23 = dma.hbm_to_vmem [thread:$0]  %s1, 6144, %s18, [#allocation3], 128, 128, 8
    $region9: #{feedforward_forward.1} parent=1 // pred_fallthru
      _
    // Predicated region
    $region10: #{feedforward_forward.1} parent=1 // pred_check
      _
    $region11: #{feedforward_forward.1} parent=1 // pred_check_branch
      %25 = sbr.rel (0) target = $region13
    $region12: #{feedforward_forward.1} parent=1 // pred_region
      _
    $region13: #{feedforward_forward.1} parent=1 // pred_fallthru
      _
    // Predicated region
    $region14: #{feedforward_forward.1} parent=1 // pred_check
      _
    $region15: #{feedforward_forward.1} parent=1 // pred_check_branch
      %27 = sbr.rel (0) target = $region17
    $region16: #{feedforward_forward.1} parent=1 // pred_region
      %28 = dma.done [#allocation3], 6144
    $region17: #{feedforward_forward.1} parent=1 // pred_fallthru
      _
    %v29 = vld [vmem:[%s0] sm:$0xff]
    %v30 = vld [vmem:[#allocation2] sm:$0xff]
    %v31 = vld [vmem:[#allocation2 + $0x8] sm:$0xff]
    %v32 = vld [vmem:[#allocation2 + $0x10] sm:$0xff]
    %v33 = vld [vmem:[#allocation2 + $0x18] sm:$0xff]
    %v34 = vld [vmem:[#allocation2 + $0x20] sm:$0xff]
    %v35 = vld [vmem:[#allocation2 + $0x28] sm:$0xff]
    %v36 = vld [vmem:[#allocation2 + $0x30] sm:$0xff]
    %v37 = vld [vmem:[#allocation2 + $0x38] sm:$0xff]
    %v38 = vld [vmem:[#allocation2 + $0x40] sm:$0xff]
    %v39 = vld [vmem:[#allocation2 + $0x48] sm:$0xff]
    %v40 = vld [vmem:[#allocation2 + $0x50] sm:$0xff]
    %v41 = vld [vmem:[#allocation2 + $0x58] sm:$0xff]
    %v42 = vld [vmem:[#allocation2 + $0x60] sm:$0xff]
    %v43 = vld [vmem:[#allocation2 + $0x68] sm:$0xff]
    %v44 = vld [vmem:[#allocation2 + $0x70] sm:$0xff]
    %v45 = vld [vmem:[#allocation2 + $0x78] sm:$0xff]
    %v46 = vld [vmem:[%s2] sm:$0x1]
    %v48 = vlaneseq
    %v49 = vshrl.u32 %v48, 7
    %v50 = vsub.s32 0, %v49
    %v51 = vrot.slane %v46, %v50
    %53 = vmatprep.subr.mxu0 0.0
    %54 = vmatpush1.msra.mxu0 %v30
    %55 = vmatprep.subr.mxu0 0.0
    %56 = vmatpush1.msra.mxu0 %v31
    %57 = vmatprep.subr.mxu0 0.0
    %58 = vmatpush1.msra.mxu0 %v32
    %59 = vmatprep.subr.mxu0 0.0
    %60 = vmatpush1.msra.mxu0 %v33
    %61 = vmatprep.subr.mxu0 0.0
    %62 = vmatpush1.msra.mxu0 %v34
    %63 = vmatprep.subr.mxu0 0.0
    %64 = vmatpush1.msra.mxu0 %v35
    %65 = vmatprep.subr.mxu0 0.0
    %66 = vmatpush1.msra.mxu0 %v36
    %67 = vmatprep.subr.mxu0 0.0
    %68 = vmatpush1.msra.mxu0 %v37
    %69 = vmatprep.subr.mxu0 0.0
    %70 = vmatpush1.msra.mxu0 %v38
    %71 = vmatprep.subr.mxu0 0.0
    %72 = vmatpush1.msra.mxu0 %v39
    %73 = vmatprep.subr.mxu0 0.0
    %74 = vmatpush1.msra.mxu0 %v40
    %75 = vmatprep.subr.mxu0 0.0
    %76 = vmatpush1.msra.mxu0 %v41
    %77 = vmatprep.subr.mxu0 0.0
    %78 = vmatpush1.msra.mxu0 %v42
    %79 = vmatprep.subr.mxu0 0.0
    %80 = vmatpush1.msra.mxu0 %v43
    %81 = vmatprep.subr.mxu0 0.0
    %82 = vmatpush1.msra.mxu0 %v44
    %83 = vmatprep.subr.mxu0 0.0
    %84 = vmatpush1.msra.mxu0 %v45
    %85 = vmatprep.subr.mxu0 0.0
    %86 = vmatpush1.msra.mxu0 0.0
    %87 = vmatprep.subr.mxu0 0.0
    %88 = vmatpush1.msra.mxu0 0.0
    %89 = vmatprep.subr.mxu0 0.0
    %90 = vmatpush1.msra.mxu0 0.0
    %91 = vmatprep.subr.mxu0 0.0
    %92 = vmatpush1.msra.mxu0 0.0
    %93 = vmatprep.subr.mxu0 0.0
    %94 = vmatpush1.msra.mxu0 0.0
    %95 = vmatprep.subr.mxu0 0.0
    %96 = vmatpush1.msra.mxu0 0.0
    %97 = vmatprep.subr.mxu0 0.0
    %98 = vmatpush1.msra.mxu0 0.0
    %99 = vmatprep.subr.mxu0 0.0
    %100 = vmatpush1.msra.mxu0 0.0
    %101 = vmatprep.subr.mxu0 0.0
    %102 = vmatpush1.msra.mxu0 0.0
    %103 = vmatprep.subr.mxu0 0.0
    %104 = vmatpush1.msra.mxu0 0.0
    %105 = vmatprep.subr.mxu0 0.0
    %106 = vmatpush1.msra.mxu0 0.0
    %107 = vmatprep.subr.mxu0 0.0
    %108 = vmatpush1.msra.mxu0 0.0
    %109 = vmatprep.subr.mxu0 0.0
    %110 = vmatpush1.msra.mxu0 0.0
    %111 = vmatprep.subr.mxu0 0.0
    %112 = vmatpush1.msra.mxu0 0.0
    %113 = vmatprep.subr.mxu0 0.0
    %114 = vmatpush1.msra.mxu0 0.0
    %115 = vmatprep.subr.mxu0 0.0
    %116 = vmatpush1.msra.mxu0 0.0
    %117 = vmatprep.mubr.f32.mxu0 0.0
    %118 = vmatmul.mubr.f32.gmra.mrb[0].mxu0 %v29
    %v119 = vpop.f32.mrb[0].mxu0
    %v120 = vadd.f32 %v51, %v119
    %v121 = vpop.f32.mrb[0].mxu0
    %122 = vdwg.mxu0
    %v123 = vmax.f32 %v120, 0.0
    %s124 = scalar_lea.vmem [#allocation2], 128
    %v125 = vld [vmem:[%s124] sm:$0xff]
    %v126 = vld [vmem:[%s124 + $0x8] sm:$0xff]
    %v127 = vld [vmem:[%s124 + $0x10] sm:$0xff]
    %v128 = vld [vmem:[%s124 + $0x18] sm:$0xff]
    %v129 = vld [vmem:[%s124 + $0x20] sm:$0xff]
    %v130 = vld [vmem:[%s124 + $0x28] sm:$0xff]
    %v131 = vld [vmem:[%s124 + $0x30] sm:$0xff]
    %v132 = vld [vmem:[%s124 + $0x38] sm:$0xff]
    %v133 = vld [vmem:[%s124 + $0x40] sm:$0xff]
    %v134 = vld [vmem:[%s124 + $0x48] sm:$0xff]
    %v135 = vld [vmem:[%s124 + $0x50] sm:$0xff]
    %v136 = vld [vmem:[%s124 + $0x58] sm:$0xff]
    %v137 = vld [vmem:[%s124 + $0x60] sm:$0xff]
    %v138 = vld [vmem:[%s124 + $0x68] sm:$0xff]
    %v139 = vld [vmem:[%s124 + $0x70] sm:$0xff]
    %v140 = vld [vmem:[%s124 + $0x78] sm:$0xff]
    %s141 = scalar_lea.vmem %s2, 1
    %v142 = vld [vmem:[%s141] sm:$0x1]
    %v144 = vlaneseq
    %v145 = vshrl.u32 %v144, 7
    %v146 = vsub.s32 0, %v145
    %v147 = vrot.slane %v142, %v146
    %149 = vmatprep.subr.mxu0 0.0
    %150 = vmatpush1.msra.mxu0 %v125
    %151 = vmatprep.subr.mxu0 0.0
    %152 = vmatpush1.msra.mxu0 %v126
    %153 = vmatprep.subr.mxu0 0.0
    %154 = vmatpush1.msra.mxu0 %v127
    %155 = vmatprep.subr.mxu0 0.0
    %156 = vmatpush1.msra.mxu0 %v128
    %157 = vmatprep.subr.mxu0 0.0
    %158 = vmatpush1.msra.mxu0 %v129
    %159 = vmatprep.subr.mxu0 0.0
    %160 = vmatpush1.msra.mxu0 %v130
    %161 = vmatprep.subr.mxu0 0.0
    %162 = vmatpush1.msra.mxu0 %v131
    %163 = vmatprep.subr.mxu0 0.0
    %164 = vmatpush1.msra.mxu0 %v132
    %165 = vmatprep.subr.mxu0 0.0
    %166 = vmatpush1.msra.mxu0 %v133
    %167 = vmatprep.subr.mxu0 0.0
    %168 = vmatpush1.msra.mxu0 %v134
    %169 = vmatprep.subr.mxu0 0.0
    %170 = vmatpush1.msra.mxu0 %v135
    %171 = vmatprep.subr.mxu0 0.0
    %172 = vmatpush1.msra.mxu0 %v136
    %173 = vmatprep.subr.mxu0 0.0
    %174 = vmatpush1.msra.mxu0 %v137
    %175 = vmatprep.subr.mxu0 0.0
    %176 = vmatpush1.msra.mxu0 %v138
    %177 = vmatprep.subr.mxu0 0.0
    %178 = vmatpush1.msra.mxu0 %v139
    %179 = vmatprep.subr.mxu0 0.0
    %180 = vmatpush1.msra.mxu0 %v140
    %181 = vmatprep.subr.mxu0 0.0
    %182 = vmatpush1.msra.mxu0 0.0
    %183 = vmatprep.subr.mxu0 0.0
    %184 = vmatpush1.msra.mxu0 0.0
    %185 = vmatprep.subr.mxu0 0.0
    %186 = vmatpush1.msra.mxu0 0.0
    %187 = vmatprep.subr.mxu0 0.0
    %188 = vmatpush1.msra.mxu0 0.0
    %189 = vmatprep.subr.mxu0 0.0
    %190 = vmatpush1.msra.mxu0 0.0
    %191 = vmatprep.subr.mxu0 0.0
    %192 = vmatpush1.msra.mxu0 0.0
    %193 = vmatprep.subr.mxu0 0.0
    %194 = vmatpush1.msra.mxu0 0.0
    %195 = vmatprep.subr.mxu0 0.0
    %196 = vmatpush1.msra.mxu0 0.0
    %197 = vmatprep.subr.mxu0 0.0
    %198 = vmatpush1.msra.mxu0 0.0
    %199 = vmatprep.subr.mxu0 0.0
    %200 = vmatpush1.msra.mxu0 0.0
    %201 = vmatprep.subr.mxu0 0.0
    %202 = vmatpush1.msra.mxu0 0.0
    %203 = vmatprep.subr.mxu0 0.0
    %204 = vmatpush1.msra.mxu0 0.0
    %205 = vmatprep.subr.mxu0 0.0
    %206 = vmatpush1.msra.mxu0 0.0
    %207 = vmatprep.subr.mxu0 0.0
    %208 = vmatpush1.msra.mxu0 0.0
    %209 = vmatprep.subr.mxu0 0.0
    %210 = vmatpush1.msra.mxu0 0.0
    %211 = vmatprep.subr.mxu0 0.0
    %212 = vmatpush1.msra.mxu0 0.0
    %213 = vmatprep.mubr.f32.mxu0 0.0
    %214 = vmatmul.mubr.f32.gmra.mrb[0].mxu0 %v123
    %v215 = vpop.f32.mrb[0].mxu0
    %v216 = vadd.f32 %v147, %v215
    %v217 = vpop.f32.mrb[0].mxu0
    %218 = vdwg.mxu0
    %v219 = vmax.f32 %v216, 0.0
    %s220 = scalar_lea.vmem [#allocation2], 256
    %v221 = vld [vmem:[%s220] sm:$0xff]
    %v222 = vld [vmem:[%s220 + $0x8] sm:$0xff]
    %v223 = vld [vmem:[%s220 + $0x10] sm:$0xff]
    %v224 = vld [vmem:[%s220 + $0x18] sm:$0xff]
    %v225 = vld [vmem:[%s220 + $0x20] sm:$0xff]
    %v226 = vld [vmem:[%s220 + $0x28] sm:$0xff]
    %v227 = vld [vmem:[%s220 + $0x30] sm:$0xff]
    %v228 = vld [vmem:[%s220 + $0x38] sm:$0xff]
    %v229 = vld [vmem:[%s220 + $0x40] sm:$0xff]
    %v230 = vld [vmem:[%s220 + $0x48] sm:$0xff]
    %v231 = vld [vmem:[%s220 + $0x50] sm:$0xff]
    %v232 = vld [vmem:[%s220 + $0x58] sm:$0xff]
    %v233 = vld [vmem:[%s220 + $0x60] sm:$0xff]
    %v234 = vld [vmem:[%s220 + $0x68] sm:$0xff]
    %v235 = vld [vmem:[%s220 + $0x70] sm:$0xff]
    %v236 = vld [vmem:[%s220 + $0x78] sm:$0xff]
    %s237 = scalar_lea.vmem %s2, 2
    %v238 = vld [vmem:[%s237] sm:$0x1]
    %v240 = vlaneseq
    %v241 = vshrl.u32 %v240, 7
    %v242 = vsub.s32 0, %v241
    %v243 = vrot.slane %v238, %v242
    %245 = vmatprep.subr.mxu0 0.0
    %246 = vmatpush1.msra.mxu0 %v221
    %247 = vmatprep.subr.mxu0 0.0
    %248 = vmatpush1.msra.mxu0 %v222
    %249 = vmatprep.subr.mxu0 0.0
    %250 = vmatpush1.msra.mxu0 %v223
    %251 = vmatprep.subr.mxu0 0.0
    %252 = vmatpush1.msra.mxu0 %v224
    %253 = vmatprep.subr.mxu0 0.0
    %254 = vmatpush1.msra.mxu0 %v225
    %255 = vmatprep.subr.mxu0 0.0
    %256 = vmatpush1.msra.mxu0 %v226
    %257 = vmatprep.subr.mxu0 0.0
    %258 = vmatpush1.msra.mxu0 %v227
    %259 = vmatprep.subr.mxu0 0.0
    %260 = vmatpush1.msra.mxu0 %v228
    %261 = vmatprep.subr.mxu0 0.0
    %262 = vmatpush1.msra.mxu0 %v229
    %263 = vmatprep.subr.mxu0 0.0
    %264 = vmatpush1.msra.mxu0 %v230
    %265 = vmatprep.subr.mxu0 0.0
    %266 = vmatpush1.msra.mxu0 %v231
    %267 = vmatprep.subr.mxu0 0.0
    %268 = vmatpush1.msra.mxu0 %v232
    %269 = vmatprep.subr.mxu0 0.0
    %270 = vmatpush1.msra.mxu0 %v233
    %271 = vmatprep.subr.mxu0 0.0
    %272 = vmatpush1.msra.mxu0 %v234
    %273 = vmatprep.subr.mxu0 0.0
    %274 = vmatpush1.msra.mxu0 %v235
    %275 = vmatprep.subr.mxu0 0.0
    %276 = vmatpush1.msra.mxu0 %v236
    %277 = vmatprep.subr.mxu0 0.0
    %278 = vmatpush1.msra.mxu0 0.0
    %279 = vmatprep.subr.mxu0 0.0
    %280 = vmatpush1.msra.mxu0 0.0
    %281 = vmatprep.subr.mxu0 0.0
    %282 = vmatpush1.msra.mxu0 0.0
    %283 = vmatprep.subr.mxu0 0.0
    %284 = vmatpush1.msra.mxu0 0.0
    %285 = vmatprep.subr.mxu0 0.0
    %286 = vmatpush1.msra.mxu0 0.0
    %287 = vmatprep.subr.mxu0 0.0
    %288 = vmatpush1.msra.mxu0 0.0
    %289 = vmatprep.subr.mxu0 0.0
    %290 = vmatpush1.msra.mxu0 0.0
    %291 = vmatprep.subr.mxu0 0.0
    %292 = vmatpush1.msra.mxu0 0.0
    %293 = vmatprep.subr.mxu0 0.0
    %294 = vmatpush1.msra.mxu0 0.0
    %295 = vmatprep.subr.mxu0 0.0
    %296 = vmatpush1.msra.mxu0 0.0
    %297 = vmatprep.subr.mxu0 0.0
    %298 = vmatpush1.msra.mxu0 0.0
    %299 = vmatprep.subr.mxu0 0.0
    %300 = vmatpush1.msra.mxu0 0.0
    %301 = vmatprep.subr.mxu0 0.0
    %302 = vmatpush1.msra.mxu0 0.0
    %303 = vmatprep.subr.mxu0 0.0
    %304 = vmatpush1.msra.mxu0 0.0
    %305 = vmatprep.subr.mxu0 0.0
    %306 = vmatpush1.msra.mxu0 0.0
    %307 = vmatprep.subr.mxu0 0.0
    %308 = vmatpush1.msra.mxu0 0.0
    %309 = vmatprep.mubr.f32.mxu0 0.0
    %310 = vmatmul.mubr.f32.gmra.mrb[0].mxu0 %v219
    %v311 = vpop.f32.mrb[0].mxu0
    %v312 = vadd.f32 %v243, %v311
    %v313 = vpop.f32.mrb[0].mxu0
    %314 = vdwg.mxu0
    %v315 = vmax.f32 %v312, 0.0
    %316 = vst [vmem:[#allocation5] sm:$0xff] %v315
    // Predicated region
    $region18: #{feedforward_forward.1} parent=1 // pred_check
      _
    $region19: #{feedforward_forward.1} parent=1 // pred_check_branch
      %318 = sbr.rel (0) target = $region21
    $region20: #{feedforward_forward.1} parent=1 // pred_region
      %s320 = ssub.s32 128, 128
      %321 = vsyncadd [#allocation4], %s320
      %s323 = sshll.u32 [#allocation5], 4
      %s324 = int_to_ptr.vmem [resolvable:$true] %s323
      %326 = dma.vmem_to_hbm [thread:$0]  %s324, 128, %s3, [#allocation4]
    $region21: #{feedforward_forward.1} parent=1 // pred_fallthru
      _
    // Predicated region
    $region22: #{feedforward_forward.1} parent=1 // pred_check
      _
    $region23: #{feedforward_forward.1} parent=1 // pred_check_branch
      %328 = sbr.rel (0) target = $region25
    $region24: #{feedforward_forward.1} parent=1 // pred_region
      %329 = dma.done [#allocation4], 128
    $region25: #{feedforward_forward.1} parent=1 // pred_fallthru
      _
    %330 = vsyncpa [#allocation3], 1
    %331 = vsyncpa [#allocation4], 1

</llo_original>
